<compile_context>
chip_gen: v6e
topology: v6e:2x2x1
jax: 0.10.0
libtpu: 0.0.40
codegen_flags: <defaults>
</compile_context>

<pallas_src>
import functools

import jax
import jax.numpy as jnp
from jax.experimental import pallas as pl
from jax.experimental.pallas import tpu as pltpu


def _join_kernel(patches_ref, z2_ref, w_ref, x_ref, logdet_ref, *, B, Cin):
    """Single grid step; whole (small) batch processed at once.

    patches_ref : (B, 9*Cin, H*W)  im2col'd circularly-shifted x1 (channels-first)
    z2_ref      : (B, Cin,   H*W)
    w_ref       : (2*Cin, 9*Cin)   conv weights: taps folded into K, exp(lsf) folded
                                   in, output channels permuted to [m-half|logs-half]
    x_ref       : (B, 2*Cin, H*W)  full output: rows [:Cin]=x1, rows [Cin:]=x2
    logdet_ref  : (1, B)           per-batch logdet
    """
    w = w_ref[...]                                   # (2*Cin, 9*Cin) -- hoisted
    logdets = []
    for b in range(B):                               # B is small & static -> unrolled
        p = patches_ref[b]                           # (9*Cin, H*W), lane-dense
        # 3x3 circular conv + scale as ONE fused K=9*Cin contraction.
        h = jnp.dot(w, p, preferred_element_type=jnp.float32)   # (2*Cin, H*W)
        m = h[:Cin]
        logs = h[Cin:]
        x2 = m + z2_ref[b] * jnp.exp(logs)
        # Center tap (dy=1, dx=1) of the patches is exactly x1 -> emit the
        # channel-concat [x1 | x2] directly (one unmasked (2*Cin, H*W) store).
        x1 = p[4 * Cin:5 * Cin]
        x_ref[b] = jnp.concatenate([x1, x2], axis=0)
        logdets.append(jnp.sum(logs).reshape(1, 1))
    logdet_ref[...] = jnp.concatenate(logdets, axis=1)           # (1, B)


def join_forward(x1_nchw, z2_nchw, conv_weight_oihw, log_scale_factor):
    """Pallas implementation of Join.forward.

    x1_nchw, z2_nchw  : (B, Cg, H, W)      (Cg = n_channels // 2)
    conv_weight_oihw  : (2*Cg, Cg, 3, 3)
    log_scale_factor  : (2*Cg, 1, 1)
    returns (x, logdet) with x: (B, 2*Cg, H, W), logdet: (B,)
    """
    B, Cin, H, W = x1_nchw.shape
    Cout = 2 * Cin
    HW = H * W

    x1 = x1_nchw.astype(jnp.float32)
    z2 = z2_nchw.astype(jnp.float32).reshape(B, Cin, HW)

    # --- glue: permute output channels so [even|odd] -> [m-half | logs-half],
    #     fold exp(log_scale_factor) into the weight rows (conv is linear in W).
    perm = jnp.concatenate([jnp.arange(0, Cout, 2), jnp.arange(1, Cout, 2)])
    w = conv_weight_oihw.astype(jnp.float32)[perm]               # (Cout, Cin, 3, 3)
    scale = jnp.exp(log_scale_factor.astype(jnp.float32).reshape(Cout))[perm]
    # (cout, dy, dx, cin) -> (Cout, 9*Cin); K index = (dy*3 + dx)*Cin + cin
    w_mat = jnp.transpose(w, (0, 2, 3, 1)).reshape(Cout, 9 * Cin) * scale[:, None]

    # --- im2col with circular wrap (padding_mode='circular'):
    # shifted_tap(y, x) = x1(y + dy - 1 mod H, x + dx - 1 mod W)
    shifted = [jnp.roll(x1, shift=(1 - dy, 1 - dx), axis=(2, 3))
               for dy in range(3) for dx in range(3)]
    patches = jnp.stack(shifted, axis=1).reshape(B, 9 * Cin, HW)  # (B, 36, H*W)

    kernel = functools.partial(_join_kernel, B=B, Cin=Cin)

    x_flat, logdet_row = pl.pallas_call(
        kernel,
        out_shape=(
            jax.ShapeDtypeStruct((B, Cout, HW), jnp.float32),
            jax.ShapeDtypeStruct((1, B), jnp.float32),
        ),
        grid_spec=pltpu.PrefetchScalarGridSpec(
            num_scalar_prefetch=0,
            grid=(1,),                                # batch fused into one step
            in_specs=[
                pl.BlockSpec((B, 9 * Cin, HW), lambda i: (0, 0, 0)),
                pl.BlockSpec((B, Cin, HW), lambda i: (0, 0, 0)),
                pl.BlockSpec((Cout, 9 * Cin), lambda i: (0, 0)),
            ],
            out_specs=[
                pl.BlockSpec((B, Cout, HW), lambda i: (0, 0, 0)),
                pl.BlockSpec((1, B), lambda i: (0, 0)),
            ],
        ),
        compiler_params=pltpu.CompilerParams(
            dimension_semantics=("arbitrary",)),
    )(patches, z2, w_mat)

    # Free row-major reshape: kernel already produced NCHW channel order [x1|x2].
    x = x_flat.reshape(B, Cout, H, W)
    logdet = logdet_row[0]
    return x, logdet


def _reference_forward(x1_nchw, z2_nchw, conv_weight_oihw, log_scale_factor):
    """Pure-JAX reference matching the PyTorch module exactly."""
    xp = jnp.pad(x1_nchw, ((0, 0), (0, 0), (1, 1), (1, 1)), mode='wrap')
    h = jax.lax.conv_general_dilated(
        xp, conv_weight_oihw, window_strides=(1, 1), padding='VALID',
        dimension_numbers=('NCHW', 'OIHW', 'NCHW'))
    h = h * jnp.exp(log_scale_factor)[None]          # (1, 2Cg, 1, 1) broadcast
    m = h[:, 0::2, :, :]
    logs = h[:, 1::2, :, :]
    x2 = m + z2_nchw * jnp.exp(logs)
    logdet = logs.sum(axis=(1, 2, 3))
    x = jnp.concatenate([x1_nchw, x2], axis=1)
    return x, logdet


if __name__ == "__main__":
    # Join(n_channels=8) -> Gaussianize(n_channels=4): Cg = 4
    B, Cg, H, W = 2, 4, 16, 16

    key = jax.random.PRNGKey(0)
    k1, k2, k3, k4 = jax.random.split(key, 4)

    # NOTE: the PyTorch __init__ zeroes these parameters (identity init).
    # We initialize them deterministically with small random values so the
    # conv / elementwise / reduction paths are actually exercised.
    conv_weight = 0.1 * jax.random.normal(k1, (2 * Cg, Cg, 3, 3), jnp.float32)
    log_scale_factor = 0.1 * jax.random.normal(k2, (2 * Cg, 1, 1), jnp.float32)

    x1 = jax.random.normal(k3, (B, Cg, H, W), jnp.float32)
    z2 = jax.random.normal(k4, (B, Cg, H, W), jnp.float32)

    x_out, logdet = join_forward(x1, z2, conv_weight, log_scale_factor)
    jax.block_until_ready((x_out, logdet))

    x_ref, logdet_ref = _reference_forward(x1, z2, conv_weight, log_scale_factor)
    assert x_out.shape == (B, 2 * Cg, H, W)
    assert logdet.shape == (B,)
    assert jnp.allclose(x_out, x_ref, atol=5e-4, rtol=5e-4)
    assert jnp.allclose(logdet, logdet_ref, atol=2e-3, rtol=1e-4)

    print("KERNEL_OK")
</pallas_src>

<mosaic_0001>
module attributes {stable_mosaic.version = 11 : i64} {
  func.func @_join_kernel(%arg0: i32, %arg1: memref<2x36x256xf32, #tpu.memory_space<vmem>>, %arg2: memref<2x4x256xf32, #tpu.memory_space<vmem>>, %arg3: memref<8x36xf32, #tpu.memory_space<vmem>>, %arg4: memref<2x8x256xf32, #tpu.memory_space<vmem>>, %arg5: memref<1x2xf32, #tpu.memory_space<vmem>>) attributes {dimension_semantics = [#tpu.dimension_semantics<arbitrary>], iteration_bounds = array<i64: 1>, scalar_prefetch = 0 : i64, scratch_operands = 0 : i64, tpu.core_type = #tpu.core_type<tc>, window_params = [{pipeline_mode = #tpu.pipeline_mode<synchronous>, transform_indices = @transform_0, window_bounds = array<i64: 2, 36, 256>}, {pipeline_mode = #tpu.pipeline_mode<synchronous>, transform_indices = @transform_1, window_bounds = array<i64: 2, 4, 256>}, {pipeline_mode = #tpu.pipeline_mode<synchronous>, transform_indices = @transform_2, window_bounds = array<i64: 8, 36>}, {pipeline_mode = #tpu.pipeline_mode<synchronous>, transform_indices = @transform_3, window_bounds = array<i64: 2, 8, 256>}, {pipeline_mode = #tpu.pipeline_mode<synchronous>, transform_indices = @transform_4, window_bounds = array<i64: 1, 2>}]} {
    %c0 = arith.constant 0 : index
    %c0_0 = arith.constant 0 : index
    %0 = vector.load %arg3[%c0, %c0_0] : memref<8x36xf32, #tpu.memory_space<vmem>>, vector<8x36xf32>
    %c0_1 = arith.constant 0 : index
    %c0_2 = arith.constant 0 : index
    %c0_3 = arith.constant 0 : index
    %1 = vector.load %arg1[%c0_1, %c0_2, %c0_3] : memref<2x36x256xf32, #tpu.memory_space<vmem>>, vector<1x36x256xf32>
    %2 = vector.shape_cast %1 : vector<1x36x256xf32> to vector<36x256xf32>
    %cst = arith.constant dense<0.000000e+00> : vector<8x256xf32>
    %3 = tpu.matmul %0, %2, %cst {dimension_numbers = #tpu.dot_dimension_numbers<[1], [0], [0], [1], [0, 0, 1, 1], [], []>} : vector<8x36xf32>, vector<36x256xf32>, vector<8x256xf32> -> vector<8x256xf32>
    %4 = vector.extract_strided_slice %3 {offsets = [0, 0], sizes = [4, 256], strides = [1, 1]} : vector<8x256xf32> to vector<4x256xf32>
    %5 = vector.extract_strided_slice %3 {offsets = [4, 0], sizes = [4, 256], strides = [1, 1]} : vector<8x256xf32> to vector<4x256xf32>
    %c0_4 = arith.constant 0 : index
    %c0_5 = arith.constant 0 : index
    %c0_6 = arith.constant 0 : index
    %6 = vector.load %arg2[%c0_4, %c0_5, %c0_6] : memref<2x4x256xf32, #tpu.memory_space<vmem>>, vector<1x4x256xf32>
    %7 = vector.shape_cast %6 : vector<1x4x256xf32> to vector<4x256xf32>
    %8 = math.exp %5 : vector<4x256xf32>
    %9 = arith.mulf %7, %8 : vector<4x256xf32>
    %10 = arith.addf %4, %9 : vector<4x256xf32>
    %11 = vector.extract_strided_slice %2 {offsets = [16, 0], sizes = [4, 256], strides = [1, 1]} : vector<36x256xf32> to vector<4x256xf32>
    %12 = tpu.concatenate %11, %10 in 0 : vector<4x256xf32>, vector<4x256xf32> -> vector<8x256xf32>
    %c0_7 = arith.constant 0 : index
    %c0_8 = arith.constant 0 : index
    %c0_9 = arith.constant 0 : index
    %13 = vector.load %arg4[%c0_7, %c0_8, %c0_9] : memref<2x8x256xf32, #tpu.memory_space<vmem>>, vector<1x8x256xf32>
    %14 = vector.shape_cast %13 : vector<1x8x256xf32> to vector<8x256xf32>
    %15 = vector.shape_cast %12 : vector<8x256xf32> to vector<1x8x256xf32>
    tpu.vector_store %arg4[%c0_7, %c0_8, %c0_9], %15 {strides = array<i32>} : memref<2x8x256xf32, #tpu.memory_space<vmem>>, vector<1x8x256xf32>,
    %16 = vector.shape_cast %5 : vector<4x256xf32> to vector<1x4x256xf32>
    %cst_10 = arith.constant dense<0.000000e+00> : vector<1xf32>
    %17 = vector.multi_reduction <add>, %16, %cst_10 [1, 2] : vector<1x4x256xf32> to vector<1xf32>
    %18 = vector.shape_cast %17 : vector<1xf32> to vector<1x1x1xf32>
    %19 = vector.extract %18[0, 0, 0] : f32 from vector<1x1x1xf32>
    %20 = vector.broadcast %19 : f32 to vector<1x1xf32>
    %c1 = arith.constant 1 : index
    %c0_11 = arith.constant 0 : index
    %c0_12 = arith.constant 0 : index
    %21 = vector.load %arg1[%c1, %c0_11, %c0_12] : memref<2x36x256xf32, #tpu.memory_space<vmem>>, vector<1x36x256xf32>
    %22 = vector.shape_cast %21 : vector<1x36x256xf32> to vector<36x256xf32>
    %cst_13 = arith.constant dense<0.000000e+00> : vector<8x256xf32>
    %23 = tpu.matmul %0, %22, %cst_13 {dimension_numbers = #tpu.dot_dimension_numbers<[1], [0], [0], [1], [0, 0, 1, 1], [], []>} : vector<8x36xf32>, vector<36x256xf32>, vector<8x256xf32> -> vector<8x256xf32>
    %24 = vector.extract_strided_slice %23 {offsets = [0, 0], sizes = [4, 256], strides = [1, 1]} : vector<8x256xf32> to vector<4x256xf32>
    %25 = vector.extract_strided_slice %23 {offsets = [4, 0], sizes = [4, 256], strides = [1, 1]} : vector<8x256xf32> to vector<4x256xf32>
    %c1_14 = arith.constant 1 : index
    %c0_15 = arith.constant 0 : index
    %c0_16 = arith.constant 0 : index
    %26 = vector.load %arg2[%c1_14, %c0_15, %c0_16] : memref<2x4x256xf32, #tpu.memory_space<vmem>>, vector<1x4x256xf32>
    %27 = vector.shape_cast %26 : vector<1x4x256xf32> to vector<4x256xf32>
    %28 = math.exp %25 : vector<4x256xf32>
    %29 = arith.mulf %27, %28 : vector<4x256xf32>
    %30 = arith.addf %24, %29 : vector<4x256xf32>
    %31 = vector.extract_strided_slice %22 {offsets = [16, 0], sizes = [4, 256], strides = [1, 1]} : vector<36x256xf32> to vector<4x256xf32>
    %32 = tpu.concatenate %31, %30 in 0 : vector<4x256xf32>, vector<4x256xf32> -> vector<8x256xf32>
    %c1_17 = arith.constant 1 : index
    %c0_18 = arith.constant 0 : index
    %c0_19 = arith.constant 0 : index
    %33 = vector.load %arg4[%c1_17, %c0_18, %c0_19] : memref<2x8x256xf32, #tpu.memory_space<vmem>>, vector<1x8x256xf32>
    %34 = vector.shape_cast %33 : vector<1x8x256xf32> to vector<8x256xf32>
    %35 = vector.shape_cast %32 : vector<8x256xf32> to vector<1x8x256xf32>
    tpu.vector_store %arg4[%c1_17, %c0_18, %c0_19], %35 {strides = array<i32>} : memref<2x8x256xf32, #tpu.memory_space<vmem>>, vector<1x8x256xf32>,
    %36 = vector.shape_cast %25 : vector<4x256xf32> to vector<1x4x256xf32>
    %cst_20 = arith.constant dense<0.000000e+00> : vector<1xf32>
    %37 = vector.multi_reduction <add>, %36, %cst_20 [1, 2] : vector<1x4x256xf32> to vector<1xf32>
    %38 = vector.shape_cast %37 : vector<1xf32> to vector<1x1x1xf32>
    %39 = vector.extract %38[0, 0, 0] : f32 from vector<1x1x1xf32>
    %40 = vector.broadcast %39 : f32 to vector<1x1xf32>
    %41 = tpu.concatenate %20, %40 in 1 : vector<1x1xf32>, vector<1x1xf32> -> vector<1x2xf32>
    %c0_21 = arith.constant 0 : index
    %c0_22 = arith.constant 0 : index
    %42 = vector.load %arg5[%c0_21, %c0_22] : memref<1x2xf32, #tpu.memory_space<vmem>>, vector<1x2xf32>
    tpu.vector_store %arg5[%c0_21, %c0_22], %41 {strides = array<i32>} : memref<1x2xf32, #tpu.memory_space<vmem>>, vector<1x2xf32>,
    return
  }
  func.func @transform_0(%arg0: i32) -> (i32, i32, i32) {
    %c0_i32 = arith.constant 0 : i32
    %c0_i32_0 = arith.constant 0 : i32
    %c0_i32_1 = arith.constant 0 : i32
    %c0_i32_2 = arith.constant 0 : i32
    return %c0_i32, %c0_i32_0, %c0_i32_1 : i32, i32, i32
  }
  func.func @transform_1(%arg0: i32) -> (i32, i32, i32) {
    %c0_i32 = arith.constant 0 : i32
    %c0_i32_0 = arith.constant 0 : i32
    %c0_i32_1 = arith.constant 0 : i32
    %c0_i32_2 = arith.constant 0 : i32
    return %c0_i32, %c0_i32_0, %c0_i32_1 : i32, i32, i32
  }
  func.func @transform_2(%arg0: i32) -> (i32, i32) {
    %c0_i32 = arith.constant 0 : i32
    %c0_i32_0 = arith.constant 0 : i32
    %c0_i32_1 = arith.constant 0 : i32
    return %c0_i32, %c0_i32_0 : i32, i32
  }
  func.func @transform_3(%arg0: i32) -> (i32, i32, i32) {
    %c0_i32 = arith.constant 0 : i32
    %c0_i32_0 = arith.constant 0 : i32
    %c0_i32_1 = arith.constant 0 : i32
    %c0_i32_2 = arith.constant 0 : i32
    return %c0_i32, %c0_i32_0, %c0_i32_1 : i32, i32, i32
  }
  func.func @transform_4(%arg0: i32) -> (i32, i32) {
    %c0_i32 = arith.constant 0 : i32
    %c0_i32_0 = arith.constant 0 : i32
    %c0_i32_1 = arith.constant 0 : i32
    return %c0_i32, %c0_i32_0 : i32, i32
  }
}

</mosaic_0001>

<llo_original>
// kernel: tpu_custom_call.1
$region0: #{tpu_custom_call.1}
  #allocation0 [shape = 'u32[]', space=smem, size = 0x4, offset = 0x4, fixed_abs, tag = 'smem constant byte address 0x4 - core index']
  #allocation1 [shape = 'u32[144,128]{1,0:T(1,128)}', space=vmem, size = 0x12000, scoped, tag = 'internal scratch']
  %s0 = inlined_call_operand.vmem [shape: f32[2,36,256], index: 0, kind: input, shape index: {}]
  %s1 = inlined_call_operand.vmem [shape: f32[2,4,256], index: 1, kind: input, shape index: {}]
  %s2 = inlined_call_operand.vmem [shape: f32[8,36], index: 2, kind: input, shape index: {}]
  %s3 = inlined_call_operand.hbm [shape: f32[2,8,256], index: 3, kind: output, shape index: {0}]
  %s4 = inlined_call_operand.hbm [shape: f32[1,2], index: 4, kind: output, shape index: {1}]
  %5 = xla_tuple %s3, %s4
  %s6 = sld [smem:[#allocation0]]
  $region30: #{tpu_custom_call.1} parent=0
    _
  %s8 = ssub.s32 1, %s6
  %s9 = scalar_select 0, %s8, %s6
  $region1: #{tpu_custom_call.1} parent=0
    #allocation2 [shape = 'u8[16384]{0}', space=vmem, size = 0x4000, scoped, tag = 'output window, operand 0, single buffered']
    #allocation3 [shape = 's32[1]{0}', space=sflag, size = 0x4, scoped, tag = 'scoped memory for tpu_custom_call.1']
    #allocation4 [shape = 'u8[512]{0}', space=vmem, size = 0x400, scoped, tag = 'output window, operand 1, single buffered']
    #allocation5 [shape = 's32[1]{0}', space=sflag, size = 0x4, scoped, tag = 'scoped memory for tpu_custom_call.1']
    %10 = vsyncpa [#allocation3], 0
    %11 = vsyncpa [#allocation5], 0
    // Predicated region
    $region2: #{tpu_custom_call.1} parent=1 // pred_check
      _
    $region3: #{tpu_custom_call.1} parent=1 // pred_check_branch
      %13 = sbr.rel (0) target = $region5
    $region4: #{tpu_custom_call.1} parent=1 // pred_region
      _
    $region5: #{tpu_custom_call.1} parent=1 // pred_fallthru
      _
    // Predicated region
    $region6: #{tpu_custom_call.1} parent=1 // pred_check
      _
    $region7: #{tpu_custom_call.1} parent=1 // pred_check_branch
      %15 = sbr.rel (0) target = $region9
    $region8: #{tpu_custom_call.1} parent=1 // pred_region
      _
    $region9: #{tpu_custom_call.1} parent=1 // pred_fallthru
      _
    // Predicated region
    $region10: #{tpu_custom_call.1} parent=1 // pred_check
      _
    $region11: #{tpu_custom_call.1} parent=1 // pred_check_branch
      %17 = sbr.rel (0) target = $region13
    $region12: #{tpu_custom_call.1} parent=1 // pred_region
      _
    $region13: #{tpu_custom_call.1} parent=1 // pred_fallthru
      _
    %v18 = vld [vmem:[%s2] sm:$0xff]
    %v19 = vld [vmem:[%s0] sm:$0xff]
    %v20 = vld [vmem:[%s0 + $0x8] sm:$0xff]
    %v21 = vld [vmem:[%s0 + $0x10] sm:$0xff]
    %v22 = vld [vmem:[%s0 + $0x18] sm:$0xff]
    %v23 = vld [vmem:[%s0 + $0x20] sm:$0xff]
    %v24 = vld [vmem:[%s0 + $0x28] sm:$0xff]
    %v25 = vld [vmem:[%s0 + $0x30] sm:$0xff]
    %v26 = vld [vmem:[%s0 + $0x38] sm:$0xff]
    %v27 = vld [vmem:[%s0 + $0x40] sm:$0xf]
    %v28 = vld [vmem:[%s0 + $0x48] sm:$0xf]
    %vm29 = vcmask 293888
    %v31 = vsel %vm29, %v18, 0
    %vm33 = vcmask 1043456
    %v35 = vsel %vm33, %v27, 0
    %v38 = vsel %vm33, %v28, 0
    %40 = vmatprep.subr.mxu0 0.0
    %41 = vmatpush1.msra.mxu0 0.0
    %42 = vmatprep.subr.mxu0 0.0
    %43 = vmatpush1.msra.mxu0 0.0
    %44 = vmatprep.subr.mxu0 0.0
    %45 = vmatpush1.msra.mxu0 0.0
    %46 = vmatprep.subr.mxu0 0.0
    %47 = vmatpush1.msra.mxu0 0.0
    %48 = vmatprep.subr.mxu0 0.0
    %49 = vmatpush1.msra.mxu0 0.0
    %50 = vmatprep.subr.mxu0 0.0
    %51 = vmatpush1.msra.mxu0 0.0
    %52 = vmatprep.subr.mxu0 0.0
    %53 = vmatpush1.msra.mxu0 0.0
    %54 = vmatprep.subr.mxu0 0.0
    %55 = vmatpush1.msra.mxu0 0.0
    %56 = vmatprep.subr.mxu0 0.0
    %57 = vmatpush1.msra.mxu0 0.0
    %58 = vmatprep.subr.mxu0 0.0
    %59 = vmatpush1.msra.mxu0 0.0
    %60 = vmatprep.subr.mxu0 0.0
    %61 = vmatpush1.msra.mxu0 0.0
    %62 = vmatprep.subr.mxu0 %v38
    %63 = vmatpush1.msra.mxu0 %v35
    %64 = vmatprep.subr.mxu0 %v26
    %65 = vmatpush1.msra.mxu0 %v25
    %66 = vmatprep.subr.mxu0 %v24
    %67 = vmatpush1.msra.mxu0 %v23
    %68 = vmatprep.subr.mxu0 %v22
    %69 = vmatpush1.msra.mxu0 %v21
    %70 = vmatprep.subr.mxu0 %v20
    %71 = vmatpush1.msra.mxu0 %v19
    %72 = vmatprep.subr.mxu0 0.0
    %73 = vmatpush2.msra.mxu0 0.0
    %74 = vmatprep.subr.mxu0 0.0
    %75 = vmatpush2.msra.mxu0 0.0
    %76 = vmatprep.subr.mxu0 0.0
    %77 = vmatpush2.msra.mxu0 0.0
    %78 = vmatprep.subr.mxu0 0.0
    %79 = vmatpush2.msra.mxu0 0.0
    %80 = vmatprep.subr.mxu0 0.0
    %81 = vmatpush2.msra.mxu0 0.0
    %82 = vmatprep.subr.mxu0 0.0
    %83 = vmatpush2.msra.mxu0 0.0
    %84 = vmatprep.subr.mxu0 0.0
    %85 = vmatpush2.msra.mxu0 0.0
    %86 = vmatprep.subr.mxu0 0.0
    %87 = vmatpush2.msra.mxu0 0.0
    %88 = vmatprep.subr.mxu0 0.0
    %89 = vmatpush2.msra.mxu0 0.0
    %90 = vmatprep.subr.mxu0 0.0
    %91 = vmatpush2.msra.mxu0 0.0
    %92 = vmatprep.subr.mxu0 0.0
    %93 = vmatpush2.msra.mxu0 0.0
    %94 = vmatprep.subr.mxu0 0.0
    %95 = vmatpush2.msra.mxu0 0.0
    %96 = vmatprep.subr.mxu0 0.0
    %97 = vmatpush2.msra.mxu0 0.0
    %98 = vmatprep.subr.mxu0 0.0
    %99 = vmatpush2.msra.mxu0 0.0
    %100 = vmatprep.subr.mxu0 0.0
    %101 = vmatpush2.msra.mxu0 0.0
    %102 = vmatprep.subr.mxu0 0.0
    %103 = vmatpush2.msra.mxu0 0.0
    %104 = vmatprep.mubr.f32.mxu0 0.0
    %105 = vmatmul.mubr.f32.gmra.mxu0 %v31
    %v106 = vpop.f32.mrf.mxu0
    %v107 = vadd.f32 0.0, %v106
    %v108 = vpop.f32.mrf.mxu0
    %v109 = vadd.f32 0.0, %v108
    %110 = vdwg.mxu0
    %v111 = vld [vmem:[%s1] sm:$0xff]
    %v112 = vmul.f32 %v107, 1.442695
    %v113 = vpow.pop %v112
    %v114 = vmul.f32 %v109, 1.442695
    %v115 = vpow.pop %v114
    %v118 = vcombine.high %v113, %v115
    %v120 = vmul.f32 %v111, %v118
    %v122 = vcombine.high %v120, %v120
    %v124 = vadd.f32 %v107, %v120
    %v125 = vadd.f32 %v109, %v122
    %v128 = vrot.slane %v124, 4
    %v129 = vrot.slane %v125, 4
    %v132 = vsel %vm33, %v23, %v128
    %v133 = vsel %vm33, %v24, %v129
    %134 = vst [vmem:[#allocation2] sm:$0xff] %v132
    %135 = vst [vmem:[#allocation2 + $0x8] sm:$0xff] %v133
    %v138 = vrot.slane %v107, 4
    %v139 = vrot.slane %v109, 4
    %v142 = vsel %vm33, %v138, 0.0
    %v143 = vsel %vm33, %v139, 0.0
    %v144 = vadd.f32 %v142, %v143
    %145 = vadd.xlane.f32.xlu0 %v144
    %v146 = vpop.xlane.xlu0 %145
    %v147 = vrot.slane %v146, 4
    %v148 = vadd.f32 %v146, %v147
    %v149 = vrot.slane %v148, 2
    %v150 = vadd.f32 %v148, %v149
    %v151 = vrot.slane %v150, 1
    %v152 = vadd.f32 %v150, %v151
    %s153 = vtos %v152
    %v154 = vstv %s153
    %s155 = scalar_lea.vmem %s0, 80
    %v156 = vld [vmem:[%s155] sm:$0xff]
    %v157 = vld [vmem:[%s155 + $0x8] sm:$0xff]
    %v158 = vld [vmem:[%s155 + $0x10] sm:$0xff]
    %v159 = vld [vmem:[%s155 + $0x18] sm:$0xff]
    %v160 = vld [vmem:[%s155 + $0x20] sm:$0xff]
    %v161 = vld [vmem:[%s155 + $0x28] sm:$0xff]
    %v162 = vld [vmem:[%s155 + $0x30] sm:$0xff]
    %v163 = vld [vmem:[%s155 + $0x38] sm:$0xff]
    %v164 = vld [vmem:[%s155 + $0x40] sm:$0xf]
    %v165 = vld [vmem:[%s155 + $0x48] sm:$0xf]
    %v167 = vsel %vm33, %v164, 0
    %v170 = vsel %vm33, %v165, 0
    %172 = vmatprep.subr.mxu0 0.0
    %173 = vmatpush1.msra.mxu0 0.0
    %174 = vmatprep.subr.mxu0 0.0
    %175 = vmatpush1.msra.mxu0 0.0
    %176 = vmatprep.subr.mxu0 0.0
    %177 = vmatpush1.msra.mxu0 0.0
    %178 = vmatprep.subr.mxu0 0.0
    %179 = vmatpush1.msra.mxu0 0.0
    %180 = vmatprep.subr.mxu0 0.0
    %181 = vmatpush1.msra.mxu0 0.0
    %182 = vmatprep.subr.mxu0 0.0
    %183 = vmatpush1.msra.mxu0 0.0
    %184 = vmatprep.subr.mxu0 0.0
    %185 = vmatpush1.msra.mxu0 0.0
    %186 = vmatprep.subr.mxu0 0.0
    %187 = vmatpush1.msra.mxu0 0.0
    %188 = vmatprep.subr.mxu0 0.0
    %189 = vmatpush1.msra.mxu0 0.0
    %190 = vmatprep.subr.mxu0 0.0
    %191 = vmatpush1.msra.mxu0 0.0
    %192 = vmatprep.subr.mxu0 0.0
    %193 = vmatpush1.msra.mxu0 0.0
    %194 = vmatprep.subr.mxu0 %v170
    %195 = vmatpush1.msra.mxu0 %v167
    %196 = vmatprep.subr.mxu0 %v163
    %197 = vmatpush1.msra.mxu0 %v162
    %198 = vmatprep.subr.mxu0 %v161
    %199 = vmatpush1.msra.mxu0 %v160
    %200 = vmatprep.subr.mxu0 %v159
    %201 = vmatpush1.msra.mxu0 %v158
    %202 = vmatprep.subr.mxu0 %v157
    %203 = vmatpush1.msra.mxu0 %v156
    %204 = vmatprep.subr.mxu0 0.0
    %205 = vmatpush2.msra.mxu0 0.0
    %206 = vmatprep.subr.mxu0 0.0
    %207 = vmatpush2.msra.mxu0 0.0
    %208 = vmatprep.subr.mxu0 0.0
    %209 = vmatpush2.msra.mxu0 0.0
    %210 = vmatprep.subr.mxu0 0.0
    %211 = vmatpush2.msra.mxu0 0.0
    %212 = vmatprep.subr.mxu0 0.0
    %213 = vmatpush2.msra.mxu0 0.0
    %214 = vmatprep.subr.mxu0 0.0
    %215 = vmatpush2.msra.mxu0 0.0
    %216 = vmatprep.subr.mxu0 0.0
    %217 = vmatpush2.msra.mxu0 0.0
    %218 = vmatprep.subr.mxu0 0.0
    %219 = vmatpush2.msra.mxu0 0.0
    %220 = vmatprep.subr.mxu0 0.0
    %221 = vmatpush2.msra.mxu0 0.0
    %222 = vmatprep.subr.mxu0 0.0
    %223 = vmatpush2.msra.mxu0 0.0
    %224 = vmatprep.subr.mxu0 0.0
    %225 = vmatpush2.msra.mxu0 0.0
    %226 = vmatprep.subr.mxu0 0.0
    %227 = vmatpush2.msra.mxu0 0.0
    %228 = vmatprep.subr.mxu0 0.0
    %229 = vmatpush2.msra.mxu0 0.0
    %230 = vmatprep.subr.mxu0 0.0
    %231 = vmatpush2.msra.mxu0 0.0
    %232 = vmatprep.subr.mxu0 0.0
    %233 = vmatpush2.msra.mxu0 0.0
    %234 = vmatprep.subr.mxu0 0.0
    %235 = vmatpush2.msra.mxu0 0.0
    %236 = vmatprep.mubr.f32.mxu0 0.0
    %237 = vmatmul.mubr.f32.gmra.mxu0 %v31
    %v238 = vpop.f32.mrf.mxu0
    %v239 = vadd.f32 0.0, %v238
    %v240 = vpop.f32.mrf.mxu0
    %v241 = vadd.f32 0.0, %v240
    %242 = vdwg.mxu0
    %s243 = scalar_lea.vmem %s1, 8
    %v244 = vld [vmem:[%s243] sm:$0xff]
    %v245 = vmul.f32 %v239, 1.442695
    %v246 = vpow.pop %v245
    %v247 = vmul.f32 %v241, 1.442695
    %v248 = vpow.pop %v247
    %v251 = vcombine.high %v246, %v248
    %v253 = vmul.f32 %v244, %v251
    %v255 = vcombine.high %v253, %v253
    %v257 = vadd.f32 %v239, %v253
    %v258 = vadd.f32 %v241, %v255
    %v261 = vrot.slane %v257, 4
    %v262 = vrot.slane %v258, 4
    %v265 = vsel %vm33, %v160, %v261
    %v266 = vsel %vm33, %v161, %v262
    %s267 = scalar_lea.vmem [#allocation2], 16
    %268 = vst [vmem:[%s267] sm:$0xff] %v265
    %269 = vst [vmem:[%s267 + $0x8] sm:$0xff] %v266
    %v272 = vrot.slane %v239, 4
    %v273 = vrot.slane %v241, 4
    %v276 = vsel %vm33, %v272, 0.0
    %v277 = vsel %vm33, %v273, 0.0
    %v278 = vadd.f32 %v276, %v277
    %279 = vadd.xlane.f32.xlu0 %v278
    %v280 = vpop.xlane.xlu0 %279
    %v281 = vrot.slane %v280, 4
    %v282 = vadd.f32 %v280, %v281
    %v283 = vrot.slane %v282, 2
    %v284 = vadd.f32 %v282, %v283
    %v285 = vrot.slane %v284, 1
    %v286 = vadd.f32 %v284, %v285
    %s287 = vtos %v286
    %v288 = vstv %s287
    %vm289 = vcmask 7168
    %v290 = vsel %vm289, %v154, %v288
    %vm291 = vcmask 8192
    %292 = vst.msk [vmem:[#allocation4] sm:$0x1] %vm291, %v290
    // Predicated region
    $region14: #{tpu_custom_call.1} parent=1 // pred_check
      _
    $region15: #{tpu_custom_call.1} parent=1 // pred_check_branch
      %294 = sbr.rel (0) target = $region17
    $region16: #{tpu_custom_call.1} parent=1 // pred_region
      %s296 = ssub.s32 512, 512
      %297 = vsyncadd [#allocation3], %s296
      %s298 = sshll.u32 [#allocation2], 4
      %s299 = int_to_ptr.vmem [resolvable:$true] %s298
      %304 = dma.vmem_to_hbm [thread:$0]  %s299, 512, %s3, [#allocation3], 256, 256, 16
    $region17: #{tpu_custom_call.1} parent=1 // pred_fallthru
      _
    // Predicated region
    $region18: #{tpu_custom_call.1} parent=1 // pred_check
      _
    $region19: #{tpu_custom_call.1} parent=1 // pred_check_branch
      %306 = sbr.rel (0) target = $region21
    $region20: #{tpu_custom_call.1} parent=1 // pred_region
      %s308 = ssub.s32 16, 16
      %309 = vsyncadd [#allocation5], %s308
      %s311 = sshll.u32 [#allocation4], 4
      %s312 = int_to_ptr.vmem [resolvable:$true] %s311
      %314 = dma.vmem_to_hbm [thread:$0]  %s312, 16, %s4, [#allocation5]
    $region21: #{tpu_custom_call.1} parent=1 // pred_fallthru
      _
    // Predicated region
    $region22: #{tpu_custom_call.1} parent=1 // pred_check
      _
    $region23: #{tpu_custom_call.1} parent=1 // pred_check_branch
      %316 = sbr.rel (0) target = $region25
    $region24: #{tpu_custom_call.1} parent=1 // pred_region
      %317 = dma.done [#allocation3], 512
    $region25: #{tpu_custom_call.1} parent=1 // pred_fallthru
      _
    // Predicated region
    $region26: #{tpu_custom_call.1} parent=1 // pred_check
      _
    $region27: #{tpu_custom_call.1} parent=1 // pred_check_branch
      %319 = sbr.rel (0) target = $region29
    $region28: #{tpu_custom_call.1} parent=1 // pred_region
      %320 = dma.done [#allocation5], 16
    $region29: #{tpu_custom_call.1} parent=1 // pred_fallthru
      _
    %321 = vsyncpa [#allocation3], 1
    %322 = vsyncpa [#allocation5], 1

</llo_original>
